<compile_context>
chip_gen: v5e
topology: v5e:2x2
jax: 0.10.0
libtpu: 0.0.40
codegen_flags: <defaults>
</compile_context>

<pallas_src>
import functools

import jax
import jax.numpy as jnp
from jax import lax
from jax.experimental import pallas as pl
from jax.experimental.pallas import tpu as pltpu


def _pool_kernel(*refs, mode, seq_len, high_precision):
    # mean: (inv_ref, x_ref, o_ref, tri_ref, carry_ref)
    # sum:  (x_ref, o_ref, tri_ref, carry_ref)
    if mode == 'mean':
        inv_ref, x_ref, o_ref, tri_ref, carry_ref = refs
    else:
        x_ref, o_ref, tri_ref, carry_ref = refs

    Bb, T, _ = x_ref.shape
    s = pl.program_id(2)

    @pl.when(s == 0)
    def _():
        # Reset the running carry and (re)build the lower-triangular matrix
        # once per (batch-block, feature-block).  Rebuilding it at s == 0 is
        # megacore-safe (scratch is per-core) and costs a few vreg ops.
        carry_ref[...] = jnp.zeros_like(carry_ref)
        row = lax.broadcasted_iota(jnp.int32, (T, T), 0)
        col = lax.broadcasted_iota(jnp.int32, (T, T), 1)
        tri_ref[...] = (row >= col).astype(tri_ref.dtype)

    tri = tri_ref[...]                                      # (T, T), x dtype
    prec = lax.Precision.HIGHEST if high_precision else None

    # Ragged last sequence block: zero out rows beyond the valid length so
    # unspecified VMEM contents can never reach the matmul.  Statically
    # elided when T divides S.
    row_ok = None
    if seq_len % T != 0:
        valid = seq_len - s * T
        row_ok = lax.broadcasted_iota(jnp.int32, (T, 1), 0) < valid

    inv = inv_ref[...] if mode == 'mean' else None          # (T, 1) f32

    for bb in range(Bb):                                    # static unroll (small)
        xb = x_ref[bb]                                      # (T, HT), native dtype
        if row_ok is not None:
            xb = jnp.where(row_ok, xb, 0)
        # Within-block cumulative sum via one MXU matmul (f32 accumulation),
        # plus the carry of all previous sequence blocks.
        csum = jnp.dot(tri, xb, preferred_element_type=jnp.float32,
                       precision=prec)                      # (T, HT) f32
        csum = csum + carry_ref[bb]                         # (1, HT) broadcast
        carry_ref[bb] = csum[T - 1:T, :]                    # new running carry
        out_b = csum * inv if mode == 'mean' else csum
        o_ref[bb] = out_b.astype(o_ref.dtype)


def _round_up(a, b):
    return ((a + b - 1) // b) * b


def pool(x, mode='mean', *, seq_block=None, feat_block=None):
    """Cumulative mean/sum pooling along axis 1. x: (B, S, H)."""
    if mode not in ('mean', 'sum'):
        # TODO(synk): 'max' mode mirrors a broken branch of the PyTorch
        # reference (torch.max(t, 0) returns a tuple); not implemented.
        raise NotImplementedError(mode)

    B, S, H = x.shape
    itemsize = jnp.dtype(x.dtype).itemsize

    # ---- sequence block ----------------------------------------------------
    if seq_block is None:
        seq_block = 256
        if x.dtype == jnp.float32:
            # v5e's MXU is 4x128^2 and ~4x slower for f32; T=128 keeps the
            # matmul off the critical path there.  v6e/v7x keep T=256.
            try:
                kind = jax.devices()[0].device_kind.lower()
            except Exception:
                kind = ""
            if "v5 lite" in kind or "v5lite" in kind or "v5e" in kind:
                seq_block = 128
    T = S if S <= seq_block else seq_block
    grid_s = pl.cdiv(S, T)

    # ---- feature tile: aim for >= ~1 MiB of input per grid step -------------
    if feat_block is None:
        feat_block = 2048 if itemsize <= 2 else 1024
    if H <= feat_block:
        HT = H                                  # full dim: always layout-legal
    else:
        h128 = _round_up(H, 128)
        n_tiles = pl.cdiv(h128, feat_block)     # fewest near-equal 128-mult tiles
        HT = _round_up(pl.cdiv(h128, n_tiles), 128)
    grid_h = pl.cdiv(H, HT)

    # ---- fold batches per step when H is tiny (denser DMAs / stores) --------
    Bb = 1
    if H < 128 and B > 1:
        target = max(1, (512 * 1024) // max(1, T * H * itemsize))
        Bb = int(max(1, min(8, target, B // 2)))   # keep >= 2 batch grid steps
    grid_b = pl.cdiv(B, Bb)

    # ---- keep >= 2 "parallel" grid steps so dual-TC chips use both cores ----
    if grid_b * grid_h < 2 and H >= 256:
        HT = _round_up(pl.cdiv(_round_up(H, 128), 2), 128)
        grid_h = pl.cdiv(H, HT)

    grid = (grid_b, grid_h, grid_s)

    in_specs = []
    operands = []
    if mode == 'mean':
        # Precomputed 1/count column: removes the per-step iota + divide.
        inv_counts = (1.0 / jnp.arange(1, S + 1, dtype=jnp.float32)).reshape(S, 1)
        in_specs.append(pl.BlockSpec((T, 1), lambda b, h, s: (s, 0)))
        operands.append(inv_counts)
    in_specs.append(pl.BlockSpec((Bb, T, HT), lambda b, h, s: (b, s, h)))
    operands.append(x)

    cost = pl.CostEstimate(
        flops=2 * grid_b * Bb * grid_s * T * T * grid_h * HT,
        transcendentals=0,
        bytes_accessed=2 * B * S * H * itemsize + (4 * S if mode == 'mean' else 0),
    )

    kernel = functools.partial(
        _pool_kernel, mode=mode, seq_len=S,
        high_precision=(x.dtype == jnp.float32))

    return pl.pallas_call(
        kernel,
        out_shape=jax.ShapeDtypeStruct((B, S, H), x.dtype),
        grid_spec=pltpu.PrefetchScalarGridSpec(
            num_scalar_prefetch=0,
            grid=grid,
            in_specs=in_specs,
            out_specs=pl.BlockSpec((Bb, T, HT), lambda b, h, s: (b, s, h)),
            scratch_shapes=[
                pltpu.VMEM((T, T), x.dtype),            # tri (built in-kernel)
                pltpu.VMEM((Bb, 1, HT), jnp.float32),   # running f32 carry
            ]),
        compiler_params=pltpu.CompilerParams(
            dimension_semantics=("parallel", "parallel", "arbitrary")),
        cost_estimate=cost,
    )(*operands)


def _pool_ref(x, mode='mean'):
    # Pure-JAX reference mirroring the PyTorch loop semantics.
    csum = jnp.cumsum(x.astype(jnp.float32), axis=1)
    if mode == 'sum':
        out = csum
    elif mode == 'mean':
        counts = jnp.arange(1, x.shape[1] + 1, dtype=jnp.float32)[None, :, None]
        out = csum / counts
    else:
        raise NotImplementedError(mode)
    return out.astype(x.dtype)


if __name__ == "__main__":
    key = jax.random.PRNGKey(0)
    k0, k1, k2, k3 = jax.random.split(key, 4)

    # 1) Small shape consistent with the module's forward (batch, seq, hidden).
    B, S, H = 2, 8, 32
    x = jax.random.normal(k0, (B, S, H), dtype=jnp.float32)
    out = jax.block_until_ready(pool(x, mode='mean'))
    ref = _pool_ref(x, mode='mean')
    assert out.shape == x.shape and out.dtype == x.dtype
    assert jnp.allclose(out, ref, atol=1e-5, rtol=1e-5), "mean mismatch vs reference"

    out_sum = jax.block_until_ready(pool(x, mode='sum'))
    assert jnp.allclose(out_sum, _pool_ref(x, mode='sum'), atol=1e-5, rtol=1e-5), \
        "sum mismatch vs reference"

    # 2) Blocked bf16 path: S > seq block (carry + masked ragged last block),
    #    H split into two 128-multiple tiles, no host-side padding.
    xb = jax.random.normal(k1, (1, 300, 640), dtype=jnp.bfloat16)
    out_b = jax.block_until_ready(pool(xb, mode='mean'))
    ref_b = _pool_ref(xb, mode='mean')
    assert out_b.shape == xb.shape and out_b.dtype == xb.dtype
    assert jnp.allclose(out_b.astype(jnp.float32), ref_b.astype(jnp.float32),
                        atol=2e-2, rtol=2e-2), "blocked bf16 mismatch vs reference"

    # 3) f32 with long sequence: exercises the f32 carry, ragged-edge masking
    #    and the HIGHEST-precision MXU path.
    xc = jax.random.normal(k2, (1, 300, 256), dtype=jnp.float32)
    out_c = jax.block_until_ready(pool(xc, mode='mean'))
    ref_c = _pool_ref(xc, mode='mean')
    assert jnp.allclose(out_c, ref_c, atol=1e-3, rtol=1e-3), \
        "f32 long-S mismatch vs reference"

    # 4) Small-H / many-batch path: several batches folded per grid step.
    xd = jax.random.normal(k3, (8, 16, 64), dtype=jnp.float32)
    out_d = jax.block_until_ready(pool(xd, mode='mean'))
    ref_d = _pool_ref(xd, mode='mean')
    assert jnp.allclose(out_d, ref_d, atol=1e-5, rtol=1e-5), \
        "batched-block mismatch vs reference"

    print("KERNEL_OK")
</pallas_src>

<mosaic_0001>
module attributes {stable_mosaic.version = 11 : i64} {
  func.func @_pool_kernel(%arg0: i32, %arg1: i32, %arg2: i32, %arg3: memref<8x1xf32, #tpu.memory_space<vmem>>, %arg4: memref<1x8x32xf32, #tpu.memory_space<vmem>>, %arg5: memref<1x8x32xf32, #tpu.memory_space<vmem>>, %arg6: memref<8x8xf32, #tpu.memory_space<vmem>>, %arg7: memref<1x1x32xf32, #tpu.memory_space<vmem>>) attributes {dimension_semantics = [#tpu.dimension_semantics<parallel>, #tpu.dimension_semantics<parallel>, #tpu.dimension_semantics<arbitrary>], iteration_bounds = array<i64: 2, 1, 1>, scalar_prefetch = 0 : i64, scratch_operands = 2 : i64, tpu.core_type = #tpu.core_type<tc>, window_params = [{transform_indices = @transform_0, window_bounds = array<i64: 8, 1>}, {transform_indices = @transform_1, window_bounds = array<i64: 1, 8, 32>}, {transform_indices = @transform_2, window_bounds = array<i64: 1, 8, 32>}]} {
    %c0_i32 = arith.constant 0 : i32
    %0 = arith.cmpi eq, %arg2, %c0_i32 : i32
    %1 = arith.extui %0 : i1 to i32
    %c0_i32_0 = arith.constant 0 : i32
    %2 = arith.cmpi ne, %1, %c0_i32_0 : i32
    scf.if %2 {
      %cst_16 = arith.constant 0.000000e+00 : f32
      %21 = vector.broadcast %cst_16 : f32 to vector<1x1x32xf32>
      %c0_17 = arith.constant 0 : index
      %c0_18 = arith.constant 0 : index
      %c0_19 = arith.constant 0 : index
      %22 = vector.load %arg7[%c0_17, %c0_18, %c0_19] : memref<1x1x32xf32, #tpu.memory_space<vmem>>, vector<1x1x32xf32>
      tpu.vector_store %arg7[%c0_17, %c0_18, %c0_19], %21 {strides = array<i32>} : memref<1x1x32xf32, #tpu.memory_space<vmem>>, vector<1x1x32xf32>,
      %23 = tpu.iota {dimensions = array<i32: 0>} : vector<8x8xi32>
      %24 = tpu.iota {dimensions = array<i32: 1>} : vector<8x8xi32>
      %25 = arith.cmpi sge, %23, %24 : vector<8x8xi32>
      %26 = arith.extui %25 : vector<8x8xi1> to vector<8x8xi32>
      %27 = arith.sitofp %26 : vector<8x8xi32> to vector<8x8xf32>
      %c0_20 = arith.constant 0 : index
      %c0_21 = arith.constant 0 : index
      %28 = vector.load %arg6[%c0_20, %c0_21] : memref<8x8xf32, #tpu.memory_space<vmem>>, vector<8x8xf32>
      tpu.vector_store %arg6[%c0_20, %c0_21], %27 {strides = array<i32>} : memref<8x8xf32, #tpu.memory_space<vmem>>, vector<8x8xf32>,
    } else {
    }
    %c0 = arith.constant 0 : index
    %c0_1 = arith.constant 0 : index
    %3 = vector.load %arg6[%c0, %c0_1] : memref<8x8xf32, #tpu.memory_space<vmem>>, vector<8x8xf32>
    %c0_2 = arith.constant 0 : index
    %c0_3 = arith.constant 0 : index
    %4 = vector.load %arg3[%c0_2, %c0_3] : memref<8x1xf32, #tpu.memory_space<vmem>>, vector<8x1xf32>
    %c0_4 = arith.constant 0 : index
    %c0_5 = arith.constant 0 : index
    %c0_6 = arith.constant 0 : index
    %5 = vector.load %arg4[%c0_4, %c0_5, %c0_6] : memref<1x8x32xf32, #tpu.memory_space<vmem>>, vector<1x8x32xf32>
    %6 = vector.shape_cast %5 : vector<1x8x32xf32> to vector<8x32xf32>
    %cst = arith.constant dense<0.000000e+00> : vector<8x32xf32>
    %7 = tpu.matmul %3, %6, %cst {dimension_numbers = #tpu.dot_dimension_numbers<[1], [0], [0], [1], [0, 0, 1, 1], [], []>, precision = #tpu.contract_precision<fp32>} : vector<8x8xf32>, vector<8x32xf32>, vector<8x32xf32> -> vector<8x32xf32>
    %c0_7 = arith.constant 0 : index
    %c0_8 = arith.constant 0 : index
    %c0_9 = arith.constant 0 : index
    %8 = vector.load %arg7[%c0_7, %c0_8, %c0_9] : memref<1x1x32xf32, #tpu.memory_space<vmem>>, vector<1x1x32xf32>
    %9 = vector.shape_cast %8 : vector<1x1x32xf32> to vector<1x32xf32>
    %10 = vector.broadcast %9 : vector<1x32xf32> to vector<8x32xf32>
    %11 = arith.addf %7, %10 : vector<8x32xf32>
    %12 = vector.extract_strided_slice %11 {offsets = [7, 0], sizes = [1, 32], strides = [1, 1]} : vector<8x32xf32> to vector<1x32xf32>
    %c0_10 = arith.constant 0 : index
    %c0_11 = arith.constant 0 : index
    %c0_12 = arith.constant 0 : index
    %13 = vector.load %arg7[%c0_10, %c0_11, %c0_12] : memref<1x1x32xf32, #tpu.memory_space<vmem>>, vector<1x1x32xf32>
    %14 = vector.shape_cast %13 : vector<1x1x32xf32> to vector<1x32xf32>
    %15 = vector.shape_cast %12 : vector<1x32xf32> to vector<1x1x32xf32>
    tpu.vector_store %arg7[%c0_10, %c0_11, %c0_12], %15 {strides = array<i32>} : memref<1x1x32xf32, #tpu.memory_space<vmem>>, vector<1x1x32xf32>,
    %16 = vector.broadcast %4 : vector<8x1xf32> to vector<8x32xf32>
    %17 = arith.mulf %11, %16 : vector<8x32xf32>
    %c0_13 = arith.constant 0 : index
    %c0_14 = arith.constant 0 : index
    %c0_15 = arith.constant 0 : index
    %18 = vector.load %arg5[%c0_13, %c0_14, %c0_15] : memref<1x8x32xf32, #tpu.memory_space<vmem>>, vector<1x8x32xf32>
    %19 = vector.shape_cast %18 : vector<1x8x32xf32> to vector<8x32xf32>
    %20 = vector.shape_cast %17 : vector<8x32xf32> to vector<1x8x32xf32>
    tpu.vector_store %arg5[%c0_13, %c0_14, %c0_15], %20 {strides = array<i32>} : memref<1x8x32xf32, #tpu.memory_space<vmem>>, vector<1x8x32xf32>,
    return
  }
  func.func @transform_0(%arg0: i32, %arg1: i32, %arg2: i32) -> (i32, i32) {
    %c0_i32 = arith.constant 0 : i32
    %c0_i32_0 = arith.constant 0 : i32
    return %arg2, %c0_i32 : i32, i32
  }
  func.func @transform_1(%arg0: i32, %arg1: i32, %arg2: i32) -> (i32, i32, i32) {
    %c0_i32 = arith.constant 0 : i32
    return %arg0, %arg2, %arg1 : i32, i32, i32
  }
  func.func @transform_2(%arg0: i32, %arg1: i32, %arg2: i32) -> (i32, i32, i32) {
    %c0_i32 = arith.constant 0 : i32
    return %arg0, %arg2, %arg1 : i32, i32, i32
  }
}

</mosaic_0001>

<llo_original>
// kernel: tpu_custom_call.1
$region0: #{tpu_custom_call.1}
  #allocation0 [shape = 'u32[]', space=smem, size = 0x4, offset = 0x4, fixed_abs, tag = 'smem constant byte address 0x4 - core index']
  #allocation1 [shape = 'u32[72,128]{1,0:T(1,128)}', space=vmem, size = 0x9000, scoped, tag = 'internal scratch']
  #allocation2 [shape = 'f32[8,8]{1,0:T(8,128)}', space=vmem, size = 0x1000, scoped, tag = 'scratch operand']
  #allocation3 [shape = 'f32[1,1,32]{2,1,0:T(1,128)}', space=vmem, size = 0x200, scoped, tag = 'scratch operand']
  %s0 = inlined_call_operand.vmem [shape: f32[8,1], index: 0, kind: input, shape index: {}]
  %s1 = inlined_call_operand.hbm [shape: f32[2,8,32], index: 1, kind: input, shape index: {}]
  %s2 = inlined_call_operand.hbm [shape: f32[2,8,32], index: 2, kind: output, shape index: {}]
  %s3 = sld [smem:[#allocation0]]
  $region49: #{tpu_custom_call.1} parent=0
    _
  %s5 = ssub.s32 1, %s3
  %s6 = scalar_select 0, %s5, %s3
  $region1: #{tpu_custom_call.1} parent=0
    #allocation4 [shape = 'u8[8192]{0}', space=vmem, size = 0x2000, scoped, tag = 'input window, operand 1']
    #allocation5 [shape = 's32[2]{0}', space=sflag, size = 0x8, scoped, tag = 'scoped memory for tpu_custom_call.1']
    #allocation6 [shape = 's32[2]{0}', space=sflag, size = 0x8, scoped, tag = 'scoped memory for tpu_custom_call.1']
    #allocation7 [shape = 'u8[8192]{0}', space=vmem, size = 0x2000, scoped, tag = 'output window, operand 0']
    %7 = vsyncpa [#allocation5], 0
    %s8 = scalar_lea.sflag [#allocation5], 1
    %9 = vsyncpa %s8, 0
    %10 = vsyncpa [#allocation6], 0
    %s11 = scalar_lea.sflag [#allocation6], 1
    %12 = vsyncpa %s11, 0
    loop: start=0, step=1, limit=4
    $region2: #{tpu_custom_call.1} parent=1 // loop_pre_header
      _
    $region3: #{tpu_custom_call.1} parent=1 // loop_header
      %s14 = sphi 0, %s18
      %p15 = scmp.ge.s32.totalorder %s14, 4
      %s21 = sphi 0, %s40
      %s22 = sphi 0, %s36
      %s23 = sphi 0, %s32
      %s24 = sphi 0, %s21
      %s25 = sphi 0, %s22
      %s26 = sphi 0, %s23
      %s27 = sphi 0, %s24
      %s28 = sphi 0, %s25
      %s29 = sphi 0, %s26
      %s43 = sphi 0, %s45
      %s46 = sphi 0, %s43
      %s47 = sphi 0, %s46
      %s63 = sphi 0, %s47
      %s73 = sphi 0, %s75
      %s76 = sphi 0, %s73
      %s77 = sphi 0, %s76
      %s93 = sphi 0, %s77
      %s103 = sphi 0, %s105
      %s106 = sphi 0, %s103
      %s107 = sphi 0, %s106
      %s123 = sphi 0, %s107
    $region4: #{tpu_custom_call.1} parent=1 // loop_header_branch
      %17 = sbr.rel (%p15) target = $region8
    $region5: #{tpu_custom_call.1} parent=1 // loop_body
      %s19 = ssub.s32 %s14, 1
      %s20 = ssub.s32 %s14, 2
      %s30 = sadd.s32 1, %s23
      %p31 = scmp.ge.s32.totalorder %s30, 1
      %s32 = scalar_select %p31, 0, %s30
      %s33 = sadd.s32 1, %s22
      %s34 = scalar_select %p31, %s33, %s22
      %p35 = scmp.ge.s32.totalorder %s34, 1
      %s36 = scalar_select %p35, 0, %s34
      %s37 = sadd.s32 1, %s21
      %s38 = scalar_select %p35, %s37, %s21
      %p39 = scmp.ge.s32.totalorder %s38, 2
      %s40 = scalar_select %p39, 0, %s38
      %s41 = ssub.s32 %s23, %s32
      %p42 = scmp.eq.s32.totalorder %s41, 0
      %s44 = sadd.s32 %s43, 1
      %s45 = scalar_select %p42, %s43, %s44
      %p48 = pneg %p42
      %p49 = scmp.eq.s32.totalorder %s14, 1
      %p50 = por %p48, %p49
      %p51 = scmp.ne.s32.totalorder %s43, %s46
      %p52 = scmp.eq.s32.totalorder %s14, 0
      %p53 = por %p51, %p52
      %p54 = scmp.ne.s32.totalorder %s43, %s46
      %p55 = scmp.eq.s32.totalorder %s19, 1
      %p56 = por %p54, %p55
      %p57 = scmp.ne.s32.totalorder %s46, %s47
      %p58 = scmp.eq.s32.totalorder %s19, 0
      %p59 = por %p57, %p58
      %p60 = scmp.ne.s32.totalorder %s46, %s47
      %p61 = scmp.eq.s32.totalorder %s20, 1
      %p62 = por %p60, %p61
      %p64 = scmp.ne.s32.totalorder %s47, %s63
      %p65 = scmp.eq.s32.totalorder %s20, 0
      %p66 = por %p64, %p65
      %s67 = ssub.s32 %s21, %s40
      %s68 = ssub.s32 %s23, %s32
      %s69 = sor.u32 %s67, %s68
      %s70 = ssub.s32 %s22, %s36
      %s71 = sor.u32 %s69, %s70
      %p72 = scmp.eq.s32.totalorder %s71, 0
      %s74 = sadd.s32 %s73, 1
      %s75 = scalar_select %p72, %s73, %s74
      %p78 = pneg %p72
      %p79 = scmp.eq.s32.totalorder %s14, 1
      %p80 = por %p78, %p79
      %p81 = scmp.ne.s32.totalorder %s73, %s76
      %p82 = scmp.eq.s32.totalorder %s14, 0
      %p83 = por %p81, %p82
      %p84 = scmp.ne.s32.totalorder %s73, %s76
      %p85 = scmp.eq.s32.totalorder %s19, 1
      %p86 = por %p84, %p85
      %p87 = scmp.ne.s32.totalorder %s76, %s77
      %p88 = scmp.eq.s32.totalorder %s19, 0
      %p89 = por %p87, %p88
      %p90 = scmp.ne.s32.totalorder %s76, %s77
      %p91 = scmp.eq.s32.totalorder %s20, 1
      %p92 = por %p90, %p91
      %p94 = scmp.ne.s32.totalorder %s77, %s93
      %p95 = scmp.eq.s32.totalorder %s20, 0
      %p96 = por %p94, %p95
      %s97 = ssub.s32 %s21, %s40
      %s98 = ssub.s32 %s23, %s32
      %s99 = sor.u32 %s97, %s98
      %s100 = ssub.s32 %s22, %s36
      %s101 = sor.u32 %s99, %s100
      %p102 = scmp.eq.s32.totalorder %s101, 0
      %s104 = sadd.s32 %s103, 1
      %s105 = scalar_select %p102, %s103, %s104
      %p108 = pneg %p102
      %p109 = scmp.eq.s32.totalorder %s14, 1
      %p110 = por %p108, %p109
      %p111 = scmp.ne.s32.totalorder %s103, %s106
      %p112 = scmp.eq.s32.totalorder %s14, 0
      %p113 = por %p111, %p112
      %p114 = scmp.ne.s32.totalorder %s103, %s106
      %p115 = scmp.eq.s32.totalorder %s19, 1
      %p116 = por %p114, %p115
      %p117 = scmp.ne.s32.totalorder %s106, %s107
      %p118 = scmp.eq.s32.totalorder %s19, 0
      %p119 = por %p117, %p118
      %p120 = scmp.ne.s32.totalorder %s106, %s107
      %p121 = scmp.eq.s32.totalorder %s20, 1
      %p122 = por %p120, %p121
      %p124 = scmp.ne.s32.totalorder %s107, %s123
      %p125 = scmp.eq.s32.totalorder %s20, 0
      %p126 = por %p124, %p125
      %p127 = scmp.le.s32.totalorder 1, %s14
      %p128 = scmp.lt.s32.totalorder %s14, 3
      %p129 = pnand %p127, %p128
      %p130 = pneg %p129
      // Predicated region
      $region9: #{tpu_custom_call.1} parent=5 // pred_check
        _
      $region10: #{tpu_custom_call.1} parent=5 // pred_check_branch
        %132 = sbr.rel (%p129) target = $region12
      $region11: #{tpu_custom_call.1} parent=5 // pred_region
        %s133 = ssub.s32 %s14, 1
        // Predicated region
        $region13: #{tpu_custom_call.1} parent=11 // pred_check
          %p134 = pneg %p59
        $region14: #{tpu_custom_call.1} parent=11 // pred_check_branch
          %136 = sbr.rel (%p134) target = $region16
        $region15: #{tpu_custom_call.1} parent=11 // pred_region
          %p137 = scmp.lt.s32.totalorder %s26, 0
          %s138 = scalar_select %p137, %s26, 0
          %s139 = smul.addr %s138, 8
          %s140 = scalar_lea.vmem %s0, %s139
        $region16: #{tpu_custom_call.1} parent=11 // pred_fallthru
          _
      $region12: #{tpu_custom_call.1} parent=5 // pred_fallthru
        _
      %p141 = scmp.lt.s32.totalorder %s14, 2
      // Predicated region
      $region17: #{tpu_custom_call.1} parent=5 // pred_check
        %p142 = pneg %p141
      $region18: #{tpu_custom_call.1} parent=5 // pred_check_branch
        %144 = sbr.rel (%p142) target = $region20
      $region19: #{tpu_custom_call.1} parent=5 // pred_region
        // Predicated region
        $region21: #{tpu_custom_call.1} parent=19 // pred_check
          %p145 = pneg %p83
        $region22: #{tpu_custom_call.1} parent=19 // pred_check_branch
          %147 = sbr.rel (%p145) target = $region24
        $region23: #{tpu_custom_call.1} parent=19 // pred_region
          %s148 = sand.u32 %s73, 1
          %s149 = scalar_lea.sflag [#allocation5], %s148
          %s150 = sand.u32 %s73, 1
          %s151 = smul.addr %s150, 8
          %s152 = scalar_lea.vmem [#allocation4], %s151
          %154 = vsyncadd %s149, 0
          %s155 = sadd.s32 %s22, %s23
          %s156 = sadd.s32 %s155, %s21
          %s157 = smul.addr %s156, 8
          %s158 = scalar_lea.hbm %s1, %s157
          %s160 = sshll.u32 %s158, 4
          %s161 = int_to_ptr.hbm [resolvable:$true] %s160
          %s162 = sshll.u32 %s152, 4
          %s163 = int_to_ptr.vmem [resolvable:$true] %s162
          %165 = dma.hbm_to_vmem [thread:$0]  %s161, 128, %s163, %s149
        $region24: #{tpu_custom_call.1} parent=19 // pred_fallthru
          _
      $region20: #{tpu_custom_call.1} parent=5 // pred_fallthru
        _
      %p166 = scmp.le.s32.totalorder 1, %s14
      %p167 = scmp.lt.s32.totalorder %s14, 3
      %p168 = pnand %p166, %p167
      %p169 = pneg %p168
      // Predicated region
      $region25: #{tpu_custom_call.1} parent=5 // pred_check
        _
      $region26: #{tpu_custom_call.1} parent=5 // pred_check_branch
        %171 = sbr.rel (%p168) target = $region28
      $region27: #{tpu_custom_call.1} parent=5 // pred_region
        %s172 = ssub.s32 %s14, 1
        %s173 = sand.u32 %s76, 1
        %s174 = scalar_lea.sflag [#allocation5], %s173
        %s175 = sand.u32 %s76, 1
        %s176 = smul.addr %s175, 8
        %s177 = scalar_lea.vmem [#allocation4], %s176
        // Predicated region
        $region29: #{tpu_custom_call.1} parent=27 // pred_check
          %p178 = pneg %p89
        $region30: #{tpu_custom_call.1} parent=27 // pred_check_branch
          %180 = sbr.rel (%p178) target = $region32
        $region31: #{tpu_custom_call.1} parent=27 // pred_region
          %182 = dma.done %s174, 128
        $region32: #{tpu_custom_call.1} parent=27 // pred_fallthru
          _
        %p183 = scmp.lt.s32.totalorder %s26, 0
        %s184 = scalar_select %p183, %s26, 0
        %s185 = smul.addr %s184, 8
        %s186 = scalar_lea.vmem %s0, %s185
        %p187 = pneg %p59
        %p188 = pneg %p56
        %s189 = sand.u32 %s76, 1
        %s190 = scalar_lea.sflag [#allocation5], %s189
        %s191 = sand.u32 %s76, 1
        %s192 = smul.addr %s191, 8
        %s193 = scalar_lea.vmem [#allocation4], %s192
        %p194 = pneg %p89
        %p195 = pneg %p86
        %p196 = pneg %p119
        %p197 = pneg %p116
        %s198 = sand.u32 %s106, 1
        %s199 = scalar_lea.sflag [#allocation6], %s198
        %s200 = sand.u32 %s106, 1
        %s201 = smul.addr %s200, 8
        %s202 = scalar_lea.vmem [#allocation7], %s201
        %p203 = scmp.lt.s32.totalorder %s26, 0
        %s204 = scalar_select %p203, %s26, 0
        %s205 = smul.addr %s204, 8
        %s206 = scalar_lea.vmem %s0, %s205
        %p207 = scmp.eq.s32.totalorder %s26, 0
        // Predicated region
        $region33: #{tpu_custom_call.1} parent=27 // pred_check
          %p208 = pneg %p207
        $region34: #{tpu_custom_call.1} parent=27 // pred_check_branch
          %210 = sbr.rel (%p208) target = $region36
        $region35: #{tpu_custom_call.1} parent=27 // pred_region
          %vm211 = vcmask 253952
          %212 = vst.msk [vmem:[#allocation3] sm:$0x1] %vm211, 0.0
          %v213 = vlaneseq
          %v214 = vshrl.u32 %v213, 7
          %v215 = vlaneseq
          %v216 = vand.u32 %v215, 127
          %vm217 = vcmp.ge.s32.totalorder %v214, %v216
          %v218 = vsel %vm217, 1, 0
          %v219 = vcvt.s32.f32 %v218
          %vm220 = vcmask 64512
          %221 = vst.msk [vmem:[#allocation2] sm:$0xff] %vm220, %v219
        $region36: #{tpu_custom_call.1} parent=27 // pred_fallthru
          _
        %v222 = vld [vmem:[#allocation2] sm:$0xff]
        %v223 = vld [vmem:[%s206] sm:$0xff]
        %v224 = vld [vmem:[%s177] sm:$0xff]
        %v225 = vld [vmem:[#allocation3] sm:$0x1]
        %v227 = vperm.slane %v225, 0
        %vm229 = vcmask 64512
        %v231 = vsel %vm229, %v222, 0
        %233 = vmatpush.msra.mxu0 0.0
        %234 = vmatpush.msra.mxu0 0.0
        %235 = vmatpush.msra.mxu0 0.0
        %236 = vmatpush.msra.mxu0 0.0
        %237 = vmatpush.msra.mxu0 0.0
        %238 = vmatpush.msra.mxu0 0.0
        %239 = vmatpush.msra.mxu0 0.0
        %240 = vmatpush.msra.mxu0 0.0
        %241 = vmatpush.msra.mxu0 0.0
        %242 = vmatpush.msra.mxu0 0.0
        %243 = vmatpush.msra.mxu0 0.0
        %244 = vmatpush.msra.mxu0 0.0
        %245 = vmatpush.msra.mxu0 0.0
        %246 = vmatpush.msra.mxu0 0.0
        %247 = vmatpush.msra.mxu0 0.0
        %v248 = vand.u32 %v224, 4294901760
        %249 = vmatpush.msra.mxu0 %v248
        %v250 = vand.u32 %v231, 4294901760
        %v251 = vsub.f32 %v231, %v250
        %v252 = vand.u32 %v251, 4294901760
        %v253 = vsub.f32 %v251, %v252
        %v254 = vand.u32 %v253, 4294901760
        %255 = vmatmul.f32.gmra.mxu0 %v254
        %v256 = vpop.f32.mrf.mxu0
        %v257 = vadd.f32 %v227, %v256
        %258 = vdwg.mxu0
        %259 = vmatpush.msra.mxu0 0.0
        %260 = vmatpush.msra.mxu0 0.0
        %261 = vmatpush.msra.mxu0 0.0
        %262 = vmatpush.msra.mxu0 0.0
        %263 = vmatpush.msra.mxu0 0.0
        %264 = vmatpush.msra.mxu0 0.0
        %265 = vmatpush.msra.mxu0 0.0
        %266 = vmatpush.msra.mxu0 0.0
        %267 = vmatpush.msra.mxu0 0.0
        %268 = vmatpush.msra.mxu0 0.0
        %269 = vmatpush.msra.mxu0 0.0
        %270 = vmatpush.msra.mxu0 0.0
        %271 = vmatpush.msra.mxu0 0.0
        %272 = vmatpush.msra.mxu0 0.0
        %273 = vmatpush.msra.mxu0 0.0
        %v274 = vand.u32 %v224, 4294901760
        %v275 = vsub.f32 %v224, %v274
        %v276 = vand.u32 %v275, 4294901760
        %v277 = vsub.f32 %v275, %v276
        %v278 = vand.u32 %v277, 4294901760
        %279 = vmatpush.msra.mxu0 %v278
        %v280 = vand.u32 %v231, 4294901760
        %281 = vmatmul.f32.gmra.mxu0 %v280
        %v282 = vpop.f32.mrf.mxu0
        %v283 = vadd.f32 %v257, %v282
        %284 = vdwg.mxu0
        %285 = vmatpush.msra.mxu0 0.0
        %286 = vmatpush.msra.mxu0 0.0
        %287 = vmatpush.msra.mxu0 0.0
        %288 = vmatpush.msra.mxu0 0.0
        %289 = vmatpush.msra.mxu0 0.0
        %290 = vmatpush.msra.mxu0 0.0
        %291 = vmatpush.msra.mxu0 0.0
        %292 = vmatpush.msra.mxu0 0.0
        %293 = vmatpush.msra.mxu0 0.0
        %294 = vmatpush.msra.mxu0 0.0
        %295 = vmatpush.msra.mxu0 0.0
        %296 = vmatpush.msra.mxu0 0.0
        %297 = vmatpush.msra.mxu0 0.0
        %298 = vmatpush.msra.mxu0 0.0
        %299 = vmatpush.msra.mxu0 0.0
        %v300 = vand.u32 %v224, 4294901760
        %v301 = vsub.f32 %v224, %v300
        %302 = vmatpush.msra.mxu0 %v301
        %v303 = vand.u32 %v231, 4294901760
        %v304 = vsub.f32 %v231, %v303
        %305 = vmatmul.f32.gmra.mxu0 %v304
        %v306 = vpop.f32.mrf.mxu0
        %v307 = vadd.f32 %v283, %v306
        %308 = vdwg.mxu0
        %309 = vmatpush.msra.mxu0 0.0
        %310 = vmatpush.msra.mxu0 0.0
        %311 = vmatpush.msra.mxu0 0.0
        %312 = vmatpush.msra.mxu0 0.0
        %313 = vmatpush.msra.mxu0 0.0
        %314 = vmatpush.msra.mxu0 0.0
        %315 = vmatpush.msra.mxu0 0.0
        %316 = vmatpush.msra.mxu0 0.0
        %317 = vmatpush.msra.mxu0 0.0
        %318 = vmatpush.msra.mxu0 0.0
        %319 = vmatpush.msra.mxu0 0.0
        %320 = vmatpush.msra.mxu0 0.0
        %321 = vmatpush.msra.mxu0 0.0
        %322 = vmatpush.msra.mxu0 0.0
        %323 = vmatpush.msra.mxu0 0.0
        %v324 = vand.u32 %v224, 4294901760
        %325 = vmatpush.msra.mxu0 %v324
        %v326 = vand.u32 %v231, 4294901760
        %v327 = vsub.f32 %v231, %v326
        %v328 = vand.u32 %v327, 4294901760
        %329 = vmatmul.f32.gmra.mxu0 %v328
        %v330 = vpop.f32.mrf.mxu0
        %v331 = vadd.f32 %v307, %v330
        %332 = vdwg.mxu0
        %333 = vmatpush.msra.mxu0 0.0
        %334 = vmatpush.msra.mxu0 0.0
        %335 = vmatpush.msra.mxu0 0.0
        %336 = vmatpush.msra.mxu0 0.0
        %337 = vmatpush.msra.mxu0 0.0
        %338 = vmatpush.msra.mxu0 0.0
        %339 = vmatpush.msra.mxu0 0.0
        %340 = vmatpush.msra.mxu0 0.0
        %341 = vmatpush.msra.mxu0 0.0
        %342 = vmatpush.msra.mxu0 0.0
        %343 = vmatpush.msra.mxu0 0.0
        %344 = vmatpush.msra.mxu0 0.0
        %345 = vmatpush.msra.mxu0 0.0
        %346 = vmatpush.msra.mxu0 0.0
        %347 = vmatpush.msra.mxu0 0.0
        %v348 = vand.u32 %v224, 4294901760
        %v349 = vsub.f32 %v224, %v348
        %v350 = vand.u32 %v349, 4294901760
        %351 = vmatpush.msra.mxu0 %v350
        %v352 = vand.u32 %v231, 4294901760
        %353 = vmatmul.f32.gmra.mxu0 %v352
        %v354 = vpop.f32.mrf.mxu0
        %v355 = vadd.f32 %v331, %v354
        %356 = vdwg.mxu0
        %357 = vmatpush.msra.mxu0 0.0
        %358 = vmatpush.msra.mxu0 0.0
        %359 = vmatpush.msra.mxu0 0.0
        %360 = vmatpush.msra.mxu0 0.0
        %361 = vmatpush.msra.mxu0 0.0
        %362 = vmatpush.msra.mxu0 0.0
        %363 = vmatpush.msra.mxu0 0.0
        %364 = vmatpush.msra.mxu0 0.0
        %365 = vmatpush.msra.mxu0 0.0
        %366 = vmatpush.msra.mxu0 0.0
        %367 = vmatpush.msra.mxu0 0.0
        %368 = vmatpush.msra.mxu0 0.0
        %369 = vmatpush.msra.mxu0 0.0
        %370 = vmatpush.msra.mxu0 0.0
        %371 = vmatpush.msra.mxu0 0.0
        %v372 = vand.u32 %v224, 4294901760
        %373 = vmatpush.msra.mxu0 %v372
        %v374 = vand.u32 %v231, 4294901760
        %375 = vmatmul.f32.gmra.mxu0 %v374
        %v376 = vpop.f32.mrf.mxu0
        %v377 = vadd.f32 %v355, %v376
        %378 = vdwg.mxu0
        %vm379 = vcmask 261127
        %380 = vst.msk [vmem:[#allocation3 - $0x7] sm:$0x80] %vm379, %v377
        %382 = vset.pattern.permute.xlu0 0
        %383 = vperm.xlu0 %382, %v223
        %v384 = vpop.permute.xlu0 %383
        %v386 = vmul.f32 %v377, %v384
        %vm387 = vcmask 261120
        %388 = vst.msk [vmem:[%s202] sm:$0xff] %vm387, %v386
        %s389 = sand.u32 %s106, 1
        %s390 = scalar_lea.sflag [#allocation6], %s389
        %s391 = sand.u32 %s106, 1
        %s392 = smul.addr %s391, 8
        %s393 = scalar_lea.vmem [#allocation7], %s392
        // Predicated region
        $region37: #{tpu_custom_call.1} parent=27 // pred_check
          %p394 = pneg %p116
        $region38: #{tpu_custom_call.1} parent=27 // pred_check_branch
          %396 = sbr.rel (%p394) target = $region40
        $region39: #{tpu_custom_call.1} parent=27 // pred_region
          %398 = vsyncadd %s390, 0
          %s399 = sadd.s32 %s25, %s26
          %s400 = sadd.s32 %s399, %s24
          %s401 = smul.addr %s400, 8
          %s402 = scalar_lea.hbm %s2, %s401
          %s404 = sshll.u32 %s393, 4
          %s405 = int_to_ptr.vmem [resolvable:$true] %s404
          %s406 = sshll.u32 %s402, 4
          %s407 = int_to_ptr.hbm [resolvable:$true] %s406
          %409 = dma.vmem_to_hbm [thread:$0]  %s405, 128, %s407, %s390
        $region40: #{tpu_custom_call.1} parent=27 // pred_fallthru
          _
      $region28: #{tpu_custom_call.1} parent=5 // pred_fallthru
        _
      %p410 = scmp.le.s32.totalorder 2, %s14
      // Predicated region
      $region41: #{tpu_custom_call.1} parent=5 // pred_check
        %p411 = pneg %p410
      $region42: #{tpu_custom_call.1} parent=5 // pred_check_branch
        %413 = sbr.rel (%p411) target = $region44
      $region43: #{tpu_custom_call.1} parent=5 // pred_region
        %s414 = ssub.s32 %s14, 2
        // Predicated region
        $region45: #{tpu_custom_call.1} parent=43 // pred_check
          %p415 = pneg %p122
        $region46: #{tpu_custom_call.1} parent=43 // pred_check_branch
          %417 = sbr.rel (%p415) target = $region48
        $region47: #{tpu_custom_call.1} parent=43 // pred_region
          %s418 = sand.u32 %s107, 1
          %s419 = scalar_lea.sflag [#allocation6], %s418
          %s420 = sand.u32 %s107, 1
          %s421 = smul.addr %s420, 8
          %s422 = scalar_lea.vmem [#allocation7], %s421
          %424 = dma.done %s419, 128
        $region48: #{tpu_custom_call.1} parent=43 // pred_fallthru
          _
      $region44: #{tpu_custom_call.1} parent=5 // pred_fallthru
        _
    $region6: #{tpu_custom_call.1} parent=1 // loop_footer
      %s18 = sadd.s32 1, %s14
    $region7: #{tpu_custom_call.1} parent=1 // loop_footer_branch
      %13 = sbr.rel target = $region3
    $region8: #{tpu_custom_call.1} parent=1 // loop_exit
      _
    %425 = vsyncpa [#allocation5], 1
    %s426 = scalar_lea.sflag [#allocation5], 1
    %427 = vsyncpa %s426, 1
    %428 = vsyncpa [#allocation6], 1
    %s429 = scalar_lea.sflag [#allocation6], 1
    %430 = vsyncpa %s429, 1

</llo_original>
